<compile_context>
chip_gen: v7x
topology: tpu7x:2x2x1
jax: 0.10.0
libtpu: 0.0.40
codegen_flags: <defaults>
</compile_context>

<pallas_src>
import jax
import jax.numpy as jnp
from jax.experimental import pallas as pl
from jax.experimental.pallas import tpu as pltpu

SUBLANE = 8        # TPU sublane width (second-to-last-dim alignment target)
MAX_TILE = 2048    # batch-tile cap (weights are tiny; VMEM is not a constraint)


def _round_up(x, m):
    return ((x + m - 1) // m) * m


def critic_kernel(state_ref, w1_ref, b1_ref, w2_ref, b2_ref, w3_ref, b3_ref, out_ref):
    """One batch tile of the 3-layer MLP, entirely in VMEM (f32 throughout)."""
    x = state_ref[...]  # (TB, input_dim) f32

    # fc1 + ReLU  (MXU matmul, f32 accumulate)
    h1 = jnp.dot(x, w1_ref[...], preferred_element_type=jnp.float32) + b1_ref[...]
    h1 = jnp.maximum(h1, 0.0)

    # fc2 + ReLU
    h2 = jnp.dot(h1, w2_ref[...], preferred_element_type=jnp.float32) + b2_ref[...]
    h2 = jnp.maximum(h2, 0.0)

    # output layer (no activation); narrow (TB, action_space) store
    y = jnp.dot(h2, w3_ref[...], preferred_element_type=jnp.float32) + b3_ref[...]
    out_ref[...] = y.astype(out_ref.dtype)


def critic_forward(state, w1, b1, w2, b2, w3, b3):
    """Runs the batch-tiled kernel; returns (batch, action_space).

    Expected shapes (f32):
      state: (batch, input_dim)
      w1: (input_dim, 32), b1: (1, 32)
      w2: (32, 32),        b2: (1, 32)
      w3: (32, action_space), b3: (1, action_space)
    Weights are stored (in_features, out_features), i.e. torch weight transposed.
    """
    batch, input_dim = state.shape
    hidden = w1.shape[1]
    action_space = w3.shape[1]

    # Batch tile: aim for >= 2 tiles (v7x megacore sharding) but cap tile size.
    if batch <= SUBLANE:
        tb = batch  # single tile; full-array dim satisfies the block rule
    else:
        tb = min(MAX_TILE, _round_up(pl.cdiv(batch, 2), SUBLANE))
    num_tiles = pl.cdiv(batch, tb)

    # Weights/biases: constant index maps -> VMEM-resident across batch tiles.
    resident = lambda arr: pl.BlockSpec(arr.shape, lambda i: (0, 0))

    flops = 2 * batch * (input_dim * hidden + hidden * hidden + hidden * action_space)
    bytes_accessed = 4 * (
        batch * input_dim + batch * action_space
        + w1.size + b1.size + w2.size + b2.size + w3.size + b3.size
    )

    out = pl.pallas_call(
        critic_kernel,
        out_shape=jax.ShapeDtypeStruct((batch, action_space), jnp.float32),
        grid_spec=pltpu.PrefetchScalarGridSpec(
            num_scalar_prefetch=0,
            grid=(num_tiles,),
            in_specs=[
                pl.BlockSpec((tb, input_dim), lambda i: (i, 0)),  # state: batch-tiled
                resident(w1), resident(b1),
                resident(w2), resident(b2),
                resident(w3), resident(b3),
            ],
            out_specs=pl.BlockSpec((tb, action_space), lambda i: (i, 0)),
        ),
        compiler_params=pltpu.CompilerParams(
            dimension_semantics=("parallel",),  # shard batch tiles across TCs (v7x)
        ),
        cost_estimate=pl.CostEstimate(
            flops=flops, transcendentals=0, bytes_accessed=bytes_accessed
        ),
    )(state, w1, b1, w2, b2, w3, b3)
    return out


def init_linear_params(key, in_features, out_features):
    """Deterministic init mimicking torch.nn.Linear default:
    U(-1/sqrt(fan_in), 1/sqrt(fan_in)) for both weight and bias."""
    kw, kb = jax.random.split(key)
    bound = 1.0 / jnp.sqrt(jnp.float32(in_features))
    # Stored as (in_features, out_features) == torch weight transposed.
    w = jax.random.uniform(kw, (in_features, out_features), jnp.float32, -bound, bound)
    b = jax.random.uniform(kb, (1, out_features), jnp.float32, -bound, bound)
    return w, b


def reference_forward(state, w1, b1, w2, b2, w3, b3):
    """Plain-JAX reference for correctness checking."""
    h1 = jnp.maximum(state @ w1 + b1, 0.0)
    h2 = jnp.maximum(h1 @ w2 + b2, 0.0)
    return h2 @ w3 + b3


if __name__ == "__main__":
    # Shapes consistent with the module's constructor.
    action_space = 5
    observation_space = 8
    num_agents = 3
    input_dim = 1 + observation_space * num_agents + num_agents  # = 28
    hidden = 32

    key = jax.random.PRNGKey(0)
    k_state, k1, k2, k3 = jax.random.split(key, 4)

    w1, b1 = init_linear_params(k1, input_dim, hidden)
    w2, b2 = init_linear_params(k2, hidden, hidden)
    w3, b3 = init_linear_params(k3, hidden, action_space)

    # Exercise: aligned multi-tile (256 -> 2x128), ragged last tile (100 -> 56+44),
    # and a tiny sub-sublane batch (4 -> single full-dim tile).
    for batch in (256, 100, 4):
        state = jax.random.normal(k_state, (batch, input_dim), jnp.float32)
        out = critic_forward(state, w1, b1, w2, b2, w3, b3)
        out = jax.block_until_ready(out)
        ref = reference_forward(state, w1, b1, w2, b2, w3, b3)
        assert out.shape == (batch, action_space)
        assert jnp.allclose(out, ref, atol=1e-5, rtol=1e-5), f"mismatch at batch={batch}"

    print("KERNEL_OK")
</pallas_src>

<mosaic_0001>
module attributes {stable_mosaic.version = 11 : i64} {
  func.func @critic_kernel(%arg0: i32, %arg1: memref<128x28xf32, #tpu.memory_space<vmem>>, %arg2: memref<28x32xf32, #tpu.memory_space<vmem>>, %arg3: memref<1x32xf32, #tpu.memory_space<vmem>>, %arg4: memref<32x32xf32, #tpu.memory_space<vmem>>, %arg5: memref<1x32xf32, #tpu.memory_space<vmem>>, %arg6: memref<32x5xf32, #tpu.memory_space<vmem>>, %arg7: memref<1x5xf32, #tpu.memory_space<vmem>>, %arg8: memref<128x5xf32, #tpu.memory_space<vmem>>) attributes {dimension_semantics = [#tpu.dimension_semantics<parallel>], iteration_bounds = array<i64: 2>, scalar_prefetch = 0 : i64, scratch_operands = 0 : i64, tpu.core_type = #tpu.core_type<tc>, window_params = [{transform_indices = @transform_0, window_bounds = array<i64: 128, 28>}, {pipeline_mode = #tpu.pipeline_mode<synchronous>, transform_indices = @transform_1, window_bounds = array<i64: 28, 32>}, {pipeline_mode = #tpu.pipeline_mode<synchronous>, transform_indices = @transform_2, window_bounds = array<i64: 1, 32>}, {pipeline_mode = #tpu.pipeline_mode<synchronous>, transform_indices = @transform_3, window_bounds = array<i64: 32, 32>}, {pipeline_mode = #tpu.pipeline_mode<synchronous>, transform_indices = @transform_4, window_bounds = array<i64: 1, 32>}, {pipeline_mode = #tpu.pipeline_mode<synchronous>, transform_indices = @transform_5, window_bounds = array<i64: 32, 5>}, {pipeline_mode = #tpu.pipeline_mode<synchronous>, transform_indices = @transform_6, window_bounds = array<i64: 1, 5>}, {transform_indices = @transform_7, window_bounds = array<i64: 128, 5>}]} {
    %c0 = arith.constant 0 : index
    %c0_0 = arith.constant 0 : index
    %0 = vector.load %arg1[%c0, %c0_0] : memref<128x28xf32, #tpu.memory_space<vmem>>, vector<128x28xf32>
    %c0_1 = arith.constant 0 : index
    %c0_2 = arith.constant 0 : index
    %1 = vector.load %arg2[%c0_1, %c0_2] : memref<28x32xf32, #tpu.memory_space<vmem>>, vector<28x32xf32>
    %cst = arith.constant dense<0.000000e+00> : vector<128x32xf32>
    %2 = tpu.matmul %0, %1, %cst {dimension_numbers = #tpu.dot_dimension_numbers<[1], [0], [0], [1], [0, 0, 1, 1], [], []>} : vector<128x28xf32>, vector<28x32xf32>, vector<128x32xf32> -> vector<128x32xf32>
    %c0_3 = arith.constant 0 : index
    %c0_4 = arith.constant 0 : index
    %3 = vector.load %arg3[%c0_3, %c0_4] : memref<1x32xf32, #tpu.memory_space<vmem>>, vector<1x32xf32>
    %4 = vector.broadcast %3 : vector<1x32xf32> to vector<128x32xf32>
    %5 = arith.addf %2, %4 : vector<128x32xf32>
    %cst_5 = arith.constant 0.000000e+00 : f32
    %6 = vector.broadcast %cst_5 : f32 to vector<128x32xf32>
    %7 = arith.maximumf %5, %6 : vector<128x32xf32>
    %c0_6 = arith.constant 0 : index
    %c0_7 = arith.constant 0 : index
    %8 = vector.load %arg4[%c0_6, %c0_7] : memref<32x32xf32, #tpu.memory_space<vmem>>, vector<32x32xf32>
    %cst_8 = arith.constant dense<0.000000e+00> : vector<128x32xf32>
    %9 = tpu.matmul %7, %8, %cst_8 {dimension_numbers = #tpu.dot_dimension_numbers<[1], [0], [0], [1], [0, 0, 1, 1], [], []>} : vector<128x32xf32>, vector<32x32xf32>, vector<128x32xf32> -> vector<128x32xf32>
    %c0_9 = arith.constant 0 : index
    %c0_10 = arith.constant 0 : index
    %10 = vector.load %arg5[%c0_9, %c0_10] : memref<1x32xf32, #tpu.memory_space<vmem>>, vector<1x32xf32>
    %11 = vector.broadcast %10 : vector<1x32xf32> to vector<128x32xf32>
    %12 = arith.addf %9, %11 : vector<128x32xf32>
    %cst_11 = arith.constant 0.000000e+00 : f32
    %13 = vector.broadcast %cst_11 : f32 to vector<128x32xf32>
    %14 = arith.maximumf %12, %13 : vector<128x32xf32>
    %c0_12 = arith.constant 0 : index
    %c0_13 = arith.constant 0 : index
    %15 = vector.load %arg6[%c0_12, %c0_13] : memref<32x5xf32, #tpu.memory_space<vmem>>, vector<32x5xf32>
    %cst_14 = arith.constant dense<0.000000e+00> : vector<128x5xf32>
    %16 = tpu.matmul %14, %15, %cst_14 {dimension_numbers = #tpu.dot_dimension_numbers<[1], [0], [0], [1], [0, 0, 1, 1], [], []>} : vector<128x32xf32>, vector<32x5xf32>, vector<128x5xf32> -> vector<128x5xf32>
    %c0_15 = arith.constant 0 : index
    %c0_16 = arith.constant 0 : index
    %17 = vector.load %arg7[%c0_15, %c0_16] : memref<1x5xf32, #tpu.memory_space<vmem>>, vector<1x5xf32>
    %18 = vector.broadcast %17 : vector<1x5xf32> to vector<128x5xf32>
    %19 = arith.addf %16, %18 : vector<128x5xf32>
    %c0_17 = arith.constant 0 : index
    %c0_18 = arith.constant 0 : index
    %20 = vector.load %arg8[%c0_17, %c0_18] : memref<128x5xf32, #tpu.memory_space<vmem>>, vector<128x5xf32>
    tpu.vector_store %arg8[%c0_17, %c0_18], %19 {strides = array<i32>} : memref<128x5xf32, #tpu.memory_space<vmem>>, vector<128x5xf32>,
    return
  }
  func.func @transform_0(%arg0: i32) -> (i32, i32) {
    %c0_i32 = arith.constant 0 : i32
    %c0_i32_0 = arith.constant 0 : i32
    return %arg0, %c0_i32 : i32, i32
  }
  func.func @transform_1(%arg0: i32) -> (i32, i32) {
    %c0_i32 = arith.constant 0 : i32
    %c0_i32_0 = arith.constant 0 : i32
    %c0_i32_1 = arith.constant 0 : i32
    return %c0_i32, %c0_i32_0 : i32, i32
  }
  func.func @transform_2(%arg0: i32) -> (i32, i32) {
    %c0_i32 = arith.constant 0 : i32
    %c0_i32_0 = arith.constant 0 : i32
    %c0_i32_1 = arith.constant 0 : i32
    return %c0_i32, %c0_i32_0 : i32, i32
  }
  func.func @transform_3(%arg0: i32) -> (i32, i32) {
    %c0_i32 = arith.constant 0 : i32
    %c0_i32_0 = arith.constant 0 : i32
    %c0_i32_1 = arith.constant 0 : i32
    return %c0_i32, %c0_i32_0 : i32, i32
  }
  func.func @transform_4(%arg0: i32) -> (i32, i32) {
    %c0_i32 = arith.constant 0 : i32
    %c0_i32_0 = arith.constant 0 : i32
    %c0_i32_1 = arith.constant 0 : i32
    return %c0_i32, %c0_i32_0 : i32, i32
  }
  func.func @transform_5(%arg0: i32) -> (i32, i32) {
    %c0_i32 = arith.constant 0 : i32
    %c0_i32_0 = arith.constant 0 : i32
    %c0_i32_1 = arith.constant 0 : i32
    return %c0_i32, %c0_i32_0 : i32, i32
  }
  func.func @transform_6(%arg0: i32) -> (i32, i32) {
    %c0_i32 = arith.constant 0 : i32
    %c0_i32_0 = arith.constant 0 : i32
    %c0_i32_1 = arith.constant 0 : i32
    return %c0_i32, %c0_i32_0 : i32, i32
  }
  func.func @transform_7(%arg0: i32) -> (i32, i32) {
    %c0_i32 = arith.constant 0 : i32
    %c0_i32_0 = arith.constant 0 : i32
    return %arg0, %c0_i32 : i32, i32
  }
}

</mosaic_0001>

<llo_original>
// kernel: tpu_custom_call.1
$region0: #{tpu_custom_call.1}
  #allocation0 [shape = 'u32[]', space=smem, size = 0x4, offset = 0x4, fixed_abs, tag = 'smem constant byte address 0x4 - core index']
  #allocation1 [shape = 'u32[144,128]{1,0:T(1,128)}', space=vmem, size = 0x12000, scoped, tag = 'internal scratch']
  %s0 = inlined_call_operand.vmem [shape: f32[256,28], index: 0, kind: input, shape index: {}]
  %s1 = inlined_call_operand.vmem [shape: f32[28,32], index: 1, kind: input, shape index: {}]
  %s2 = inlined_call_operand.vmem [shape: f32[1,32], index: 2, kind: input, shape index: {}]
  %s3 = inlined_call_operand.vmem [shape: f32[32,32], index: 3, kind: input, shape index: {}]
  %s4 = inlined_call_operand.vmem [shape: f32[1,32], index: 4, kind: input, shape index: {}]
  %s5 = inlined_call_operand.vmem [shape: f32[32,5], index: 5, kind: input, shape index: {}]
  %s6 = inlined_call_operand.vmem [shape: f32[1,5], index: 6, kind: input, shape index: {}]
  %s7 = inlined_call_operand.vmem [shape: f32[256,5], index: 7, kind: output, shape index: {}]
  %s8 = sld [smem:[#allocation0]]
  $region61: #{tpu_custom_call.1} parent=0
    _
  %s10 = ssub.s32 1, %s8
  %s11 = scalar_select 0, %s10, %s8
  loop: start=0, step=1, limit=4
  $region2: #{tpu_custom_call.1} parent=0 // loop_pre_header
    _
  $region3: #{tpu_custom_call.1} parent=0 // loop_header
    %s13 = sphi 0, %s17
    %p14 = scmp.ge.s32.totalorder %s13, 4
    %s23 = sphi 0, %s25
    %s26 = sphi 0, %s23
    %s27 = sphi 0, %s26
    %s43 = sphi 0, %s27
    %s47 = sphi 0, %s47
    %s49 = sphi 0, %s47
    %s50 = sphi 0, %s49
    %s64 = sphi 0, %s50
    %s68 = sphi 0, %s68
    %s70 = sphi 0, %s68
    %s71 = sphi 0, %s70
    %s85 = sphi 0, %s71
    %s89 = sphi 0, %s89
    %s91 = sphi 0, %s89
    %s92 = sphi 0, %s91
    %s106 = sphi 0, %s92
    %s110 = sphi 0, %s110
    %s112 = sphi 0, %s110
    %s113 = sphi 0, %s112
    %s127 = sphi 0, %s113
    %s131 = sphi 0, %s131
    %s133 = sphi 0, %s131
    %s134 = sphi 0, %s133
    %s148 = sphi 0, %s134
    %s152 = sphi 0, %s152
    %s154 = sphi 0, %s152
    %s155 = sphi 0, %s154
    %s169 = sphi 0, %s155
    %s175 = sphi 0, %s177
    %s178 = sphi 0, %s175
    %s179 = sphi 0, %s178
    %s195 = sphi 0, %s179
  $region4: #{tpu_custom_call.1} parent=0 // loop_header_branch
    %16 = sbr.rel (%p14) target = $region8
  $region5: #{tpu_custom_call.1} parent=0 // loop_body
    %s18 = ssub.s32 %s13, 1
    %s19 = ssub.s32 %s13, 2
    %s20 = sadd.s32 %s13, 1
    %s21 = ssub.s32 %s13, %s20
    %p22 = scmp.eq.s32.totalorder %s21, 0
    %s24 = sadd.s32 %s23, 1
    %s25 = scalar_select %p22, %s23, %s24
    %p28 = pneg %p22
    %p29 = scmp.eq.s32.totalorder %s13, 1
    %p30 = por %p28, %p29
    %p31 = scmp.ne.s32.totalorder %s23, %s26
    %p32 = scmp.eq.s32.totalorder %s13, 0
    %p33 = por %p31, %p32
    %p34 = scmp.ne.s32.totalorder %s23, %s26
    %p35 = scmp.eq.s32.totalorder %s18, 1
    %p36 = por %p34, %p35
    %p37 = scmp.ne.s32.totalorder %s26, %s27
    %p38 = scmp.eq.s32.totalorder %s18, 0
    %p39 = por %p37, %p38
    %p40 = scmp.ne.s32.totalorder %s26, %s27
    %p41 = scmp.eq.s32.totalorder %s19, 1
    %p42 = por %p40, %p41
    %p44 = scmp.ne.s32.totalorder %s27, %s43
    %p45 = scmp.eq.s32.totalorder %s19, 0
    %p46 = por %p44, %p45
    %s48 = sadd.s32 %s47, 1
    %p51 = scmp.eq.s32.totalorder %s13, 1
    %p52 = scmp.ne.s32.totalorder %s47, %s49
    %p53 = scmp.eq.s32.totalorder %s13, 0
    %p54 = por %p52, %p53
    %p55 = scmp.ne.s32.totalorder %s47, %s49
    %p56 = scmp.eq.s32.totalorder %s18, 1
    %p57 = por %p55, %p56
    %p58 = scmp.ne.s32.totalorder %s49, %s50
    %p59 = scmp.eq.s32.totalorder %s18, 0
    %p60 = por %p58, %p59
    %p61 = scmp.ne.s32.totalorder %s49, %s50
    %p62 = scmp.eq.s32.totalorder %s19, 1
    %p63 = por %p61, %p62
    %p65 = scmp.ne.s32.totalorder %s50, %s64
    %p66 = scmp.eq.s32.totalorder %s19, 0
    %p67 = por %p65, %p66
    %s69 = sadd.s32 %s68, 1
    %p72 = scmp.eq.s32.totalorder %s13, 1
    %p73 = scmp.ne.s32.totalorder %s68, %s70
    %p74 = scmp.eq.s32.totalorder %s13, 0
    %p75 = por %p73, %p74
    %p76 = scmp.ne.s32.totalorder %s68, %s70
    %p77 = scmp.eq.s32.totalorder %s18, 1
    %p78 = por %p76, %p77
    %p79 = scmp.ne.s32.totalorder %s70, %s71
    %p80 = scmp.eq.s32.totalorder %s18, 0
    %p81 = por %p79, %p80
    %p82 = scmp.ne.s32.totalorder %s70, %s71
    %p83 = scmp.eq.s32.totalorder %s19, 1
    %p84 = por %p82, %p83
    %p86 = scmp.ne.s32.totalorder %s71, %s85
    %p87 = scmp.eq.s32.totalorder %s19, 0
    %p88 = por %p86, %p87
    %s90 = sadd.s32 %s89, 1
    %p93 = scmp.eq.s32.totalorder %s13, 1
    %p94 = scmp.ne.s32.totalorder %s89, %s91
    %p95 = scmp.eq.s32.totalorder %s13, 0
    %p96 = por %p94, %p95
    %p97 = scmp.ne.s32.totalorder %s89, %s91
    %p98 = scmp.eq.s32.totalorder %s18, 1
    %p99 = por %p97, %p98
    %p100 = scmp.ne.s32.totalorder %s91, %s92
    %p101 = scmp.eq.s32.totalorder %s18, 0
    %p102 = por %p100, %p101
    %p103 = scmp.ne.s32.totalorder %s91, %s92
    %p104 = scmp.eq.s32.totalorder %s19, 1
    %p105 = por %p103, %p104
    %p107 = scmp.ne.s32.totalorder %s92, %s106
    %p108 = scmp.eq.s32.totalorder %s19, 0
    %p109 = por %p107, %p108
    %s111 = sadd.s32 %s110, 1
    %p114 = scmp.eq.s32.totalorder %s13, 1
    %p115 = scmp.ne.s32.totalorder %s110, %s112
    %p116 = scmp.eq.s32.totalorder %s13, 0
    %p117 = por %p115, %p116
    %p118 = scmp.ne.s32.totalorder %s110, %s112
    %p119 = scmp.eq.s32.totalorder %s18, 1
    %p120 = por %p118, %p119
    %p121 = scmp.ne.s32.totalorder %s112, %s113
    %p122 = scmp.eq.s32.totalorder %s18, 0
    %p123 = por %p121, %p122
    %p124 = scmp.ne.s32.totalorder %s112, %s113
    %p125 = scmp.eq.s32.totalorder %s19, 1
    %p126 = por %p124, %p125
    %p128 = scmp.ne.s32.totalorder %s113, %s127
    %p129 = scmp.eq.s32.totalorder %s19, 0
    %p130 = por %p128, %p129
    %s132 = sadd.s32 %s131, 1
    %p135 = scmp.eq.s32.totalorder %s13, 1
    %p136 = scmp.ne.s32.totalorder %s131, %s133
    %p137 = scmp.eq.s32.totalorder %s13, 0
    %p138 = por %p136, %p137
    %p139 = scmp.ne.s32.totalorder %s131, %s133
    %p140 = scmp.eq.s32.totalorder %s18, 1
    %p141 = por %p139, %p140
    %p142 = scmp.ne.s32.totalorder %s133, %s134
    %p143 = scmp.eq.s32.totalorder %s18, 0
    %p144 = por %p142, %p143
    %p145 = scmp.ne.s32.totalorder %s133, %s134
    %p146 = scmp.eq.s32.totalorder %s19, 1
    %p147 = por %p145, %p146
    %p149 = scmp.ne.s32.totalorder %s134, %s148
    %p150 = scmp.eq.s32.totalorder %s19, 0
    %p151 = por %p149, %p150
    %s153 = sadd.s32 %s152, 1
    %p156 = scmp.eq.s32.totalorder %s13, 1
    %p157 = scmp.ne.s32.totalorder %s152, %s154
    %p158 = scmp.eq.s32.totalorder %s13, 0
    %p159 = por %p157, %p158
    %p160 = scmp.ne.s32.totalorder %s152, %s154
    %p161 = scmp.eq.s32.totalorder %s18, 1
    %p162 = por %p160, %p161
    %p163 = scmp.ne.s32.totalorder %s154, %s155
    %p164 = scmp.eq.s32.totalorder %s18, 0
    %p165 = por %p163, %p164
    %p166 = scmp.ne.s32.totalorder %s154, %s155
    %p167 = scmp.eq.s32.totalorder %s19, 1
    %p168 = por %p166, %p167
    %p170 = scmp.ne.s32.totalorder %s155, %s169
    %p171 = scmp.eq.s32.totalorder %s19, 0
    %p172 = por %p170, %p171
    %s173 = ssub.s32 %s13, %s20
    %p174 = scmp.eq.s32.totalorder %s173, 0
    %s176 = sadd.s32 %s175, 1
    %s177 = scalar_select %p174, %s175, %s176
    %p180 = pneg %p174
    %p181 = scmp.eq.s32.totalorder %s13, 1
    %p182 = por %p180, %p181
    %p183 = scmp.ne.s32.totalorder %s175, %s178
    %p184 = scmp.eq.s32.totalorder %s13, 0
    %p185 = por %p183, %p184
    %p186 = scmp.ne.s32.totalorder %s175, %s178
    %p187 = scmp.eq.s32.totalorder %s18, 1
    %p188 = por %p186, %p187
    %p189 = scmp.ne.s32.totalorder %s178, %s179
    %p190 = scmp.eq.s32.totalorder %s18, 0
    %p191 = por %p189, %p190
    %p192 = scmp.ne.s32.totalorder %s178, %s179
    %p193 = scmp.eq.s32.totalorder %s19, 1
    %p194 = por %p192, %p193
    %p196 = scmp.ne.s32.totalorder %s179, %s195
    %p197 = scmp.eq.s32.totalorder %s19, 0
    %p198 = por %p196, %p197
    %p199 = scmp.le.s32.totalorder 1, %s13
    %p200 = scmp.lt.s32.totalorder %s13, 3
    %p201 = pnand %p199, %p200
    %p202 = pneg %p201
    // Predicated region
    $region9: #{tpu_custom_call.1} parent=5 // pred_check
      _
    $region10: #{tpu_custom_call.1} parent=5 // pred_check_branch
      %204 = sbr.rel (%p201) target = $region12
    $region11: #{tpu_custom_call.1} parent=5 // pred_region
      %s205 = ssub.s32 %s13, 1
      // Predicated region
      $region13: #{tpu_custom_call.1} parent=11 // pred_check
        %p206 = pneg %p60
      $region14: #{tpu_custom_call.1} parent=11 // pred_check_branch
        %208 = sbr.rel (%p206) target = $region16
      $region15: #{tpu_custom_call.1} parent=11 // pred_region
        _
      $region16: #{tpu_custom_call.1} parent=11 // pred_fallthru
        _
      // Predicated region
      $region17: #{tpu_custom_call.1} parent=11 // pred_check
        %p209 = pneg %p81
      $region18: #{tpu_custom_call.1} parent=11 // pred_check_branch
        %211 = sbr.rel (%p209) target = $region20
      $region19: #{tpu_custom_call.1} parent=11 // pred_region
        _
      $region20: #{tpu_custom_call.1} parent=11 // pred_fallthru
        _
      // Predicated region
      $region21: #{tpu_custom_call.1} parent=11 // pred_check
        %p212 = pneg %p102
      $region22: #{tpu_custom_call.1} parent=11 // pred_check_branch
        %214 = sbr.rel (%p212) target = $region24
      $region23: #{tpu_custom_call.1} parent=11 // pred_region
        _
      $region24: #{tpu_custom_call.1} parent=11 // pred_fallthru
        _
      // Predicated region
      $region25: #{tpu_custom_call.1} parent=11 // pred_check
        %p215 = pneg %p123
      $region26: #{tpu_custom_call.1} parent=11 // pred_check_branch
        %217 = sbr.rel (%p215) target = $region28
      $region27: #{tpu_custom_call.1} parent=11 // pred_region
        _
      $region28: #{tpu_custom_call.1} parent=11 // pred_fallthru
        _
      // Predicated region
      $region29: #{tpu_custom_call.1} parent=11 // pred_check
        %p218 = pneg %p144
      $region30: #{tpu_custom_call.1} parent=11 // pred_check_branch
        %220 = sbr.rel (%p218) target = $region32
      $region31: #{tpu_custom_call.1} parent=11 // pred_region
        _
      $region32: #{tpu_custom_call.1} parent=11 // pred_fallthru
        _
      // Predicated region
      $region33: #{tpu_custom_call.1} parent=11 // pred_check
        %p221 = pneg %p165
      $region34: #{tpu_custom_call.1} parent=11 // pred_check_branch
        %223 = sbr.rel (%p221) target = $region36
      $region35: #{tpu_custom_call.1} parent=11 // pred_region
        _
      $region36: #{tpu_custom_call.1} parent=11 // pred_fallthru
        _
    $region12: #{tpu_custom_call.1} parent=5 // pred_fallthru
      _
    %p224 = scmp.lt.s32.totalorder %s13, 2
    // Predicated region
    $region37: #{tpu_custom_call.1} parent=5 // pred_check
      %p225 = pneg %p224
    $region38: #{tpu_custom_call.1} parent=5 // pred_check_branch
      %227 = sbr.rel (%p225) target = $region40
    $region39: #{tpu_custom_call.1} parent=5 // pred_region
      // Predicated region
      $region41: #{tpu_custom_call.1} parent=39 // pred_check
        %p228 = pneg %p33
      $region42: #{tpu_custom_call.1} parent=39 // pred_check_branch
        %230 = sbr.rel (%p228) target = $region44
      $region43: #{tpu_custom_call.1} parent=39 // pred_region
        %s231 = smul.u32 16, %s13
        %p232 = scmp.lt.s32.totalorder %s231, 31
        %s233 = scalar_select %p232, %s231, 31
        %s234 = smul.addr %s233, 8
        %s235 = scalar_lea.vmem %s0, %s234
        %s236 = smul.u32 16, %s13
      $region44: #{tpu_custom_call.1} parent=39 // pred_fallthru
        _
    $region40: #{tpu_custom_call.1} parent=5 // pred_fallthru
      _
    %p237 = scmp.le.s32.totalorder 1, %s13
    %p238 = scmp.lt.s32.totalorder %s13, 3
    %p239 = pnand %p237, %p238
    %p240 = pneg %p239
    // Predicated region
    $region45: #{tpu_custom_call.1} parent=5 // pred_check
      _
    $region46: #{tpu_custom_call.1} parent=5 // pred_check_branch
      %242 = sbr.rel (%p239) target = $region48
    $region47: #{tpu_custom_call.1} parent=5 // pred_region
      %s243 = ssub.s32 %s13, 1
      %s244 = smul.u32 16, %s18
      %p245 = scmp.lt.s32.totalorder %s244, 31
      %s246 = scalar_select %p245, %s244, 31
      %s247 = smul.addr %s246, 8
      %s248 = scalar_lea.vmem %s0, %s247
      %p249 = pneg %p39
      %p250 = pneg %p36
      %p251 = pneg %p60
      %p252 = pneg %p57
      %p253 = pneg %p81
      %p254 = pneg %p78
      %p255 = pneg %p102
      %p256 = pneg %p99
      %p257 = pneg %p123
      %p258 = pneg %p120
      %p259 = pneg %p144
      %p260 = pneg %p141
      %p261 = pneg %p165
      %p262 = pneg %p162
      %p263 = pneg %p191
      %p264 = pneg %p188
      %s265 = smul.u32 16, %s18
      %p266 = scmp.lt.s32.totalorder %s265, 31
      %s267 = scalar_select %p266, %s265, 31
      %s268 = smul.addr %s267, 8
      %s269 = scalar_lea.vmem %s7, %s268
      %s270 = smul.u32 16, %s18
      %p271 = scmp.lt.s32.totalorder %s270, 31
      %s272 = scalar_select %p271, %s270, 31
      %s273 = smul.addr %s272, 8
      %s274 = scalar_lea.vmem %s0, %s273
      %s275 = smul.u32 16, %s18
      %s276 = smul.u32 16, %s18
      %p277 = scmp.lt.s32.totalorder %s276, 31
      %s278 = scalar_select %p277, %s276, 31
      %s279 = smul.addr %s278, 8
      %s280 = scalar_lea.vmem %s7, %s279
      %s281 = smul.u32 16, %s18
      %v282 = vld [vmem:[%s274] sm:$0xff]
      %v283 = vld [vmem:[%s274 + $0x8] sm:$0xff]
      %v284 = vld [vmem:[%s274 + $0x10] sm:$0xff]
      %v285 = vld [vmem:[%s274 + $0x18] sm:$0xff]
      %v286 = vld [vmem:[%s274 + $0x20] sm:$0xff]
      %v287 = vld [vmem:[%s274 + $0x28] sm:$0xff]
      %v288 = vld [vmem:[%s274 + $0x30] sm:$0xff]
      %v289 = vld [vmem:[%s274 + $0x38] sm:$0xff]
      %v290 = vld [vmem:[%s274 + $0x40] sm:$0xff]
      %v291 = vld [vmem:[%s274 + $0x48] sm:$0xff]
      %v292 = vld [vmem:[%s274 + $0x50] sm:$0xff]
      %v293 = vld [vmem:[%s274 + $0x58] sm:$0xff]
      %v294 = vld [vmem:[%s274 + $0x60] sm:$0xff]
      %v295 = vld [vmem:[%s274 + $0x68] sm:$0xff]
      %v296 = vld [vmem:[%s274 + $0x70] sm:$0xff]
      %v297 = vld [vmem:[%s274 + $0x78] sm:$0xff]
      %v298 = vld [vmem:[%s1] sm:$0xff]
      %v299 = vld [vmem:[%s1 + $0x8] sm:$0xff]
      %v300 = vld [vmem:[%s1 + $0x10] sm:$0xff]
      %v301 = vld [vmem:[%s1 + $0x18] sm:$0xf]
      %v302 = vld [vmem:[%s2] sm:$0x1]
      %v304 = vlaneseq
      %v305 = vshrl.u32 %v304, 7
      %v306 = vsub.s32 0, %v305
      %v307 = vrot.slane %v302, %v306
      %vm309 = vcmask 228352
      %v311 = vsel %vm309, %v282, 0
      %v314 = vsel %vm309, %v283, 0
      %v317 = vsel %vm309, %v284, 0
      %v320 = vsel %vm309, %v285, 0
      %v323 = vsel %vm309, %v286, 0
      %v326 = vsel %vm309, %v287, 0
      %v329 = vsel %vm309, %v288, 0
      %v332 = vsel %vm309, %v289, 0
      %v335 = vsel %vm309, %v290, 0
      %v338 = vsel %vm309, %v291, 0
      %v341 = vsel %vm309, %v292, 0
      %v344 = vsel %vm309, %v293, 0
      %v347 = vsel %vm309, %v294, 0
      %v350 = vsel %vm309, %v295, 0
      %v353 = vsel %vm309, %v296, 0
      %v356 = vsel %vm309, %v297, 0
      %vm358 = vcmask 1043456
      %v360 = vsel %vm358, %v301, 0
      %362 = vmatprep.subr.mxu0 0.0
      %363 = vmatpush1.msra.mxu0 %v298
      %364 = vmatprep.subr.mxu0 0.0
      %365 = vmatpush1.msra.mxu0 %v299
      %366 = vmatprep.subr.mxu0 0.0
      %367 = vmatpush1.msra.mxu0 %v300
      %368 = vmatprep.subr.mxu0 0.0
      %369 = vmatpush1.msra.mxu0 %v360
      %370 = vmatprep.subr.mxu0 0.0
      %371 = vmatpush1.msra.mxu0 0.0
      %372 = vmatprep.subr.mxu0 0.0
      %373 = vmatpush1.msra.mxu0 0.0
      %374 = vmatprep.subr.mxu0 0.0
      %375 = vmatpush1.msra.mxu0 0.0
      %376 = vmatprep.subr.mxu0 0.0
      %377 = vmatpush1.msra.mxu0 0.0
      %378 = vmatprep.subr.mxu0 0.0
      %379 = vmatpush1.msra.mxu0 0.0
      %380 = vmatprep.subr.mxu0 0.0
      %381 = vmatpush1.msra.mxu0 0.0
      %382 = vmatprep.subr.mxu0 0.0
      %383 = vmatpush1.msra.mxu0 0.0
      %384 = vmatprep.subr.mxu0 0.0
      %385 = vmatpush1.msra.mxu0 0.0
      %386 = vmatprep.subr.mxu0 0.0
      %387 = vmatpush1.msra.mxu0 0.0
      %388 = vmatprep.subr.mxu0 0.0
      %389 = vmatpush1.msra.mxu0 0.0
      %390 = vmatprep.subr.mxu0 0.0
      %391 = vmatpush1.msra.mxu0 0.0
      %392 = vmatprep.subr.mxu0 0.0
      %393 = vmatpush1.msra.mxu0 0.0
      %394 = vmatprep.subr.mxu0 0.0
      %395 = vmatpush1.msra.mxu0 0.0
      %396 = vmatprep.subr.mxu0 0.0
      %397 = vmatpush1.msra.mxu0 0.0
      %398 = vmatprep.subr.mxu0 0.0
      %399 = vmatpush1.msra.mxu0 0.0
      %400 = vmatprep.subr.mxu0 0.0
      %401 = vmatpush1.msra.mxu0 0.0
      %402 = vmatprep.subr.mxu0 0.0
      %403 = vmatpush1.msra.mxu0 0.0
      %404 = vmatprep.subr.mxu0 0.0
      %405 = vmatpush1.msra.mxu0 0.0
      %406 = vmatprep.subr.mxu0 0.0
      %407 = vmatpush1.msra.mxu0 0.0
      %408 = vmatprep.subr.mxu0 0.0
      %409 = vmatpush1.msra.mxu0 0.0
      %410 = vmatprep.subr.mxu0 0.0
      %411 = vmatpush1.msra.mxu0 0.0
      %412 = vmatprep.subr.mxu0 0.0
      %413 = vmatpush1.msra.mxu0 0.0
      %414 = vmatprep.subr.mxu0 0.0
      %415 = vmatpush1.msra.mxu0 0.0
      %416 = vmatprep.subr.mxu0 0.0
      %417 = vmatpush1.msra.mxu0 0.0
      %418 = vmatprep.subr.mxu0 0.0
      %419 = vmatpush1.msra.mxu0 0.0
      %420 = vmatprep.subr.mxu0 0.0
      %421 = vmatpush1.msra.mxu0 0.0
      %422 = vmatprep.subr.mxu0 0.0
      %423 = vmatpush1.msra.mxu0 0.0
      %424 = vmatprep.subr.mxu0 0.0
      %425 = vmatpush1.msra.mxu0 0.0
      %426 = vmatprep.mubr.f32.mxu0 0.0
      %427 = vmatmul.mubr.f32.gmra.mrb[0].mxu0 %v311
      %v428 = vpop.f32.mrb[0].mxu0
      %v429 = vadd.f32 %v307, %v428
      %v430 = vpop.f32.mrb[0].mxu0
      %431 = vmatprep.mubr.f32.mxu0 0.0
      %432 = vmatmul.mubr.f32.gmra.mrb[0].mxu0 %v314
      %v433 = vpop.f32.mrb[0].mxu0
      %v434 = vadd.f32 %v307, %v433
      %v435 = vpop.f32.mrb[0].mxu0
      %436 = vmatprep.mubr.f32.mxu0 0.0
      %437 = vmatmul.mubr.f32.gmra.mrb[0].mxu0 %v317
      %v438 = vpop.f32.mrb[0].mxu0
      %v439 = vadd.f32 %v307, %v438
      %v440 = vpop.f32.mrb[0].mxu0
      %441 = vmatprep.mubr.f32.mxu0 0.0
      %442 = vmatmul.mubr.f32.gmra.mrb[0].mxu0 %v320
      %v443 = vpop.f32.mrb[0].mxu0
      %v444 = vadd.f32 %v307, %v443
      %v445 = vpop.f32.mrb[0].mxu0
      %446 = vmatprep.mubr.f32.mxu0 0.0
      %447 = vmatmul.mubr.f32.gmra.mrb[0].mxu0 %v323
      %v448 = vpop.f32.mrb[0].mxu0
      %v449 = vadd.f32 %v307, %v448
      %v450 = vpop.f32.mrb[0].mxu0
      %451 = vmatprep.mubr.f32.mxu0 0.0
      %452 = vmatmul.mubr.f32.gmra.mrb[0].mxu0 %v326
      %v453 = vpop.f32.mrb[0].mxu0
      %v454 = vadd.f32 %v307, %v453
      %v455 = vpop.f32.mrb[0].mxu0
      %456 = vmatprep.mubr.f32.mxu0 0.0
      %457 = vmatmul.mubr.f32.gmra.mrb[0].mxu0 %v329
      %v458 = vpop.f32.mrb[0].mxu0
      %v459 = vadd.f32 %v307, %v458
      %v460 = vpop.f32.mrb[0].mxu0
      %461 = vmatprep.mubr.f32.mxu0 0.0
      %462 = vmatmul.mubr.f32.gmra.mrb[0].mxu0 %v332
      %v463 = vpop.f32.mrb[0].mxu0
      %v464 = vadd.f32 %v307, %v463
      %v465 = vpop.f32.mrb[0].mxu0
      %466 = vmatprep.mubr.f32.mxu0 0.0
      %467 = vmatmul.mubr.f32.gmra.mrb[0].mxu0 %v335
      %v468 = vpop.f32.mrb[0].mxu0
      %v469 = vadd.f32 %v307, %v468
      %v470 = vpop.f32.mrb[0].mxu0
      %471 = vmatprep.mubr.f32.mxu0 0.0
      %472 = vmatmul.mubr.f32.gmra.mrb[0].mxu0 %v338
      %v473 = vpop.f32.mrb[0].mxu0
      %v474 = vadd.f32 %v307, %v473
      %v475 = vpop.f32.mrb[0].mxu0
      %476 = vmatprep.mubr.f32.mxu0 0.0
      %477 = vmatmul.mubr.f32.gmra.mrb[0].mxu0 %v341
      %v478 = vpop.f32.mrb[0].mxu0
      %v479 = vadd.f32 %v307, %v478
      %v480 = vpop.f32.mrb[0].mxu0
      %481 = vmatprep.mubr.f32.mxu0 0.0
      %482 = vmatmul.mubr.f32.gmra.mrb[0].mxu0 %v344
      %v483 = vpop.f32.mrb[0].mxu0
      %v484 = vadd.f32 %v307, %v483
      %v485 = vpop.f32.mrb[0].mxu0
      %486 = vmatprep.mubr.f32.mxu0 0.0
      %487 = vmatmul.mubr.f32.gmra.mrb[0].mxu0 %v347
      %v488 = vpop.f32.mrb[0].mxu0
      %v489 = vadd.f32 %v307, %v488
      %v490 = vpop.f32.mrb[0].mxu0
      %491 = vmatprep.mubr.f32.mxu0 0.0
      %492 = vmatmul.mubr.f32.gmra.mrb[0].mxu0 %v350
      %v493 = vpop.f32.mrb[0].mxu0
      %v494 = vadd.f32 %v307, %v493
      %v495 = vpop.f32.mrb[0].mxu0
      %496 = vmatprep.mubr.f32.mxu0 0.0
      %497 = vmatmul.mubr.f32.gmra.mrb[0].mxu0 %v353
      %v498 = vpop.f32.mrb[0].mxu0
      %v499 = vadd.f32 %v307, %v498
      %v500 = vpop.f32.mrb[0].mxu0
      %501 = vmatprep.mubr.f32.mxu0 0.0
      %502 = vmatmul.mubr.f32.gmra.mrb[0].mxu0 %v356
      %v503 = vpop.f32.mrb[0].mxu0
      %v504 = vadd.f32 %v307, %v503
      %v505 = vpop.f32.mrb[0].mxu0
      %506 = vdwg.mxu0
      %v507 = vmax.f32 %v429, 0.0
      %v508 = vmax.f32 %v434, 0.0
      %v509 = vmax.f32 %v439, 0.0
      %v510 = vmax.f32 %v444, 0.0
      %v511 = vmax.f32 %v449, 0.0
      %v512 = vmax.f32 %v454, 0.0
      %v513 = vmax.f32 %v459, 0.0
      %v514 = vmax.f32 %v464, 0.0
      %v515 = vmax.f32 %v469, 0.0
      %v516 = vmax.f32 %v474, 0.0
      %v517 = vmax.f32 %v479, 0.0
      %v518 = vmax.f32 %v484, 0.0
      %v519 = vmax.f32 %v489, 0.0
      %v520 = vmax.f32 %v494, 0.0
      %v521 = vmax.f32 %v499, 0.0
      %v522 = vmax.f32 %v504, 0.0
      %v523 = vld [vmem:[%s3] sm:$0xff]
      %v524 = vld [vmem:[%s3 + $0x8] sm:$0xff]
      %v525 = vld [vmem:[%s3 + $0x10] sm:$0xff]
      %v526 = vld [vmem:[%s3 + $0x18] sm:$0xff]
      %v527 = vld [vmem:[%s4] sm:$0x1]
      %v529 = vlaneseq
      %v530 = vshrl.u32 %v529, 7
      %v531 = vsub.s32 0, %v530
      %v532 = vrot.slane %v527, %v531
      %vm534 = vcmask 261120
      %v536 = vsel %vm534, %v507, 0
      %v539 = vsel %vm534, %v508, 0
      %v542 = vsel %vm534, %v509, 0
      %v545 = vsel %vm534, %v510, 0
      %v548 = vsel %vm534, %v511, 0
      %v551 = vsel %vm534, %v512, 0
      %v554 = vsel %vm534, %v513, 0
      %v557 = vsel %vm534, %v514, 0
      %v560 = vsel %vm534, %v515, 0
      %v563 = vsel %vm534, %v516, 0
      %v566 = vsel %vm534, %v517, 0
      %v569 = vsel %vm534, %v518, 0
      %v572 = vsel %vm534, %v519, 0
      %v575 = vsel %vm534, %v520, 0
      %v578 = vsel %vm534, %v521, 0
      %v581 = vsel %vm534, %v522, 0
      %583 = vmatprep.subr.mxu0 0.0
      %584 = vmatpush1.msra.mxu0 %v523
      %585 = vmatprep.subr.mxu0 0.0
      %586 = vmatpush1.msra.mxu0 %v524
      %587 = vmatprep.subr.mxu0 0.0
      %588 = vmatpush1.msra.mxu0 %v525
      %589 = vmatprep.subr.mxu0 0.0
      %590 = vmatpush1.msra.mxu0 %v526
      %591 = vmatprep.subr.mxu0 0.0
      %592 = vmatpush1.msra.mxu0 0.0
      %593 = vmatprep.subr.mxu0 0.0
      %594 = vmatpush1.msra.mxu0 0.0
      %595 = vmatprep.subr.mxu0 0.0
      %596 = vmatpush1.msra.mxu0 0.0
      %597 = vmatprep.subr.mxu0 0.0
      %598 = vmatpush1.msra.mxu0 0.0
      %599 = vmatprep.subr.mxu0 0.0
      %600 = vmatpush1.msra.mxu0 0.0
      %601 = vmatprep.subr.mxu0 0.0
      %602 = vmatpush1.msra.mxu0 0.0
      %603 = vmatprep.subr.mxu0 0.0
      %604 = vmatpush1.msra.mxu0 0.0
      %605 = vmatprep.subr.mxu0 0.0
      %606 = vmatpush1.msra.mxu0 0.0
      %607 = vmatprep.subr.mxu0 0.0
      %608 = vmatpush1.msra.mxu0 0.0
      %609 = vmatprep.subr.mxu0 0.0
      %610 = vmatpush1.msra.mxu0 0.0
      %611 = vmatprep.subr.mxu0 0.0
      %612 = vmatpush1.msra.mxu0 0.0
      %613 = vmatprep.subr.mxu0 0.0
      %614 = vmatpush1.msra.mxu0 0.0
      %615 = vmatprep.subr.mxu0 0.0
      %616 = vmatpush1.msra.mxu0 0.0
      %617 = vmatprep.subr.mxu0 0.0
      %618 = vmatpush1.msra.mxu0 0.0
      %619 = vmatprep.subr.mxu0 0.0
      %620 = vmatpush1.msra.mxu0 0.0
      %621 = vmatprep.subr.mxu0 0.0
      %622 = vmatpush1.msra.mxu0 0.0
      %623 = vmatprep.subr.mxu0 0.0
      %624 = vmatpush1.msra.mxu0 0.0
      %625 = vmatprep.subr.mxu0 0.0
      %626 = vmatpush1.msra.mxu0 0.0
      %627 = vmatprep.subr.mxu0 0.0
      %628 = vmatpush1.msra.mxu0 0.0
      %629 = vmatprep.subr.mxu0 0.0
      %630 = vmatpush1.msra.mxu0 0.0
      %631 = vmatprep.subr.mxu0 0.0
      %632 = vmatpush1.msra.mxu0 0.0
      %633 = vmatprep.subr.mxu0 0.0
      %634 = vmatpush1.msra.mxu0 0.0
      %635 = vmatprep.subr.mxu0 0.0
      %636 = vmatpush1.msra.mxu0 0.0
      %637 = vmatprep.subr.mxu0 0.0
      %638 = vmatpush1.msra.mxu0 0.0
      %639 = vmatprep.subr.mxu0 0.0
      %640 = vmatpush1.msra.mxu0 0.0
      %641 = vmatprep.subr.mxu0 0.0
      %642 = vmatpush1.msra.mxu0 0.0
      %643 = vmatprep.subr.mxu0 0.0
      %644 = vmatpush1.msra.mxu0 0.0
      %645 = vmatprep.subr.mxu0 0.0
      %646 = vmatpush1.msra.mxu0 0.0
      %647 = vmatprep.mubr.f32.mxu0 0.0
      %648 = vmatmul.mubr.f32.gmra.mrb[0].mxu0 %v536
      %v649 = vpop.f32.mrb[0].mxu0
      %v650 = vadd.f32 %v532, %v649
      %v651 = vpop.f32.mrb[0].mxu0
      %652 = vmatprep.mubr.f32.mxu0 0.0
      %653 = vmatmul.mubr.f32.gmra.mrb[0].mxu0 %v539
      %v654 = vpop.f32.mrb[0].mxu0
      %v655 = vadd.f32 %v532, %v654
      %v656 = vpop.f32.mrb[0].mxu0
      %657 = vmatprep.mubr.f32.mxu0 0.0
      %658 = vmatmul.mubr.f32.gmra.mrb[0].mxu0 %v542
      %v659 = vpop.f32.mrb[0].mxu0
      %v660 = vadd.f32 %v532, %v659
      %v661 = vpop.f32.mrb[0].mxu0
      %662 = vmatprep.mubr.f32.mxu0 0.0
      %663 = vmatmul.mubr.f32.gmra.mrb[0].mxu0 %v545
      %v664 = vpop.f32.mrb[0].mxu0
      %v665 = vadd.f32 %v532, %v664
      %v666 = vpop.f32.mrb[0].mxu0
      %667 = vmatprep.mubr.f32.mxu0 0.0
      %668 = vmatmul.mubr.f32.gmra.mrb[0].mxu0 %v548
      %v669 = vpop.f32.mrb[0].mxu0
      %v670 = vadd.f32 %v532, %v669
      %v671 = vpop.f32.mrb[0].mxu0
      %672 = vmatprep.mubr.f32.mxu0 0.0
      %673 = vmatmul.mubr.f32.gmra.mrb[0].mxu0 %v551
      %v674 = vpop.f32.mrb[0].mxu0
      %v675 = vadd.f32 %v532, %v674
      %v676 = vpop.f32.mrb[0].mxu0
      %677 = vmatprep.mubr.f32.mxu0 0.0
      %678 = vmatmul.mubr.f32.gmra.mrb[0].mxu0 %v554
      %v679 = vpop.f32.mrb[0].mxu0
      %v680 = vadd.f32 %v532, %v679
      %v681 = vpop.f32.mrb[0].mxu0
      %682 = vmatprep.mubr.f32.mxu0 0.0
      %683 = vmatmul.mubr.f32.gmra.mrb[0].mxu0 %v557
      %v684 = vpop.f32.mrb[0].mxu0
      %v685 = vadd.f32 %v532, %v684
      %v686 = vpop.f32.mrb[0].mxu0
      %687 = vmatprep.mubr.f32.mxu0 0.0
      %688 = vmatmul.mubr.f32.gmra.mrb[0].mxu0 %v560
      %v689 = vpop.f32.mrb[0].mxu0
      %v690 = vadd.f32 %v532, %v689
      %v691 = vpop.f32.mrb[0].mxu0
      %692 = vmatprep.mubr.f32.mxu0 0.0
      %693 = vmatmul.mubr.f32.gmra.mrb[0].mxu0 %v563
      %v694 = vpop.f32.mrb[0].mxu0
      %v695 = vadd.f32 %v532, %v694
      %v696 = vpop.f32.mrb[0].mxu0
      %697 = vmatprep.mubr.f32.mxu0 0.0
      %698 = vmatmul.mubr.f32.gmra.mrb[0].mxu0 %v566
      %v699 = vpop.f32.mrb[0].mxu0
      %v700 = vadd.f32 %v532, %v699
      %v701 = vpop.f32.mrb[0].mxu0
      %702 = vmatprep.mubr.f32.mxu0 0.0
      %703 = vmatmul.mubr.f32.gmra.mrb[0].mxu0 %v569
      %v704 = vpop.f32.mrb[0].mxu0
      %v705 = vadd.f32 %v532, %v704
      %v706 = vpop.f32.mrb[0].mxu0
      %707 = vmatprep.mubr.f32.mxu0 0.0
      %708 = vmatmul.mubr.f32.gmra.mrb[0].mxu0 %v572
      %v709 = vpop.f32.mrb[0].mxu0
      %v710 = vadd.f32 %v532, %v709
      %v711 = vpop.f32.mrb[0].mxu0
      %712 = vmatprep.mubr.f32.mxu0 0.0
      %713 = vmatmul.mubr.f32.gmra.mrb[0].mxu0 %v575
      %v714 = vpop.f32.mrb[0].mxu0
      %v715 = vadd.f32 %v532, %v714
      %v716 = vpop.f32.mrb[0].mxu0
      %717 = vmatprep.mubr.f32.mxu0 0.0
      %718 = vmatmul.mubr.f32.gmra.mrb[0].mxu0 %v578
      %v719 = vpop.f32.mrb[0].mxu0
      %v720 = vadd.f32 %v532, %v719
      %v721 = vpop.f32.mrb[0].mxu0
      %722 = vmatprep.mubr.f32.mxu0 0.0
      %723 = vmatmul.mubr.f32.gmra.mrb[0].mxu0 %v581
      %v724 = vpop.f32.mrb[0].mxu0
      %v725 = vadd.f32 %v532, %v724
      %v726 = vpop.f32.mrb[0].mxu0
      %727 = vdwg.mxu0
      %v728 = vmax.f32 %v650, 0.0
      %v729 = vmax.f32 %v655, 0.0
      %v730 = vmax.f32 %v660, 0.0
      %v731 = vmax.f32 %v665, 0.0
      %v732 = vmax.f32 %v670, 0.0
      %v733 = vmax.f32 %v675, 0.0
      %v734 = vmax.f32 %v680, 0.0
      %v735 = vmax.f32 %v685, 0.0
      %v736 = vmax.f32 %v690, 0.0
      %v737 = vmax.f32 %v695, 0.0
      %v738 = vmax.f32 %v700, 0.0
      %v739 = vmax.f32 %v705, 0.0
      %v740 = vmax.f32 %v710, 0.0
      %v741 = vmax.f32 %v715, 0.0
      %v742 = vmax.f32 %v720, 0.0
      %v743 = vmax.f32 %v725, 0.0
      %v744 = vld [vmem:[%s5] sm:$0xff]
      %v745 = vld [vmem:[%s5 + $0x8] sm:$0xff]
      %v746 = vld [vmem:[%s5 + $0x10] sm:$0xff]
      %v747 = vld [vmem:[%s5 + $0x18] sm:$0xff]
      %v748 = vld [vmem:[%s6] sm:$0x1]
      %v750 = vlaneseq
      %v751 = vshrl.u32 %v750, 7
      %v752 = vsub.s32 0, %v751
      %v753 = vrot.slane %v748, %v752
      %v756 = vsel %vm534, %v728, 0
      %v759 = vsel %vm534, %v729, 0
      %v762 = vsel %vm534, %v730, 0
      %v765 = vsel %vm534, %v731, 0
      %v768 = vsel %vm534, %v732, 0
      %v771 = vsel %vm534, %v733, 0
      %v774 = vsel %vm534, %v734, 0
      %v777 = vsel %vm534, %v735, 0
      %v780 = vsel %vm534, %v736, 0
      %v783 = vsel %vm534, %v737, 0
      %v786 = vsel %vm534, %v738, 0
      %v789 = vsel %vm534, %v739, 0
      %v792 = vsel %vm534, %v740, 0
      %v795 = vsel %vm534, %v741, 0
      %v798 = vsel %vm534, %v742, 0
      %v801 = vsel %vm534, %v743, 0
      %803 = vmatprep.subr.mxu0 0.0
      %804 = vmatpush1.msra.mxu0 %v744
      %805 = vmatprep.subr.mxu0 0.0
      %806 = vmatpush1.msra.mxu0 %v745
      %807 = vmatprep.subr.mxu0 0.0
      %808 = vmatpush1.msra.mxu0 %v746
      %809 = vmatprep.subr.mxu0 0.0
      %810 = vmatpush1.msra.mxu0 %v747
      %811 = vmatprep.subr.mxu0 0.0
      %812 = vmatpush1.msra.mxu0 0.0
      %813 = vmatprep.subr.mxu0 0.0
      %814 = vmatpush1.msra.mxu0 0.0
      %815 = vmatprep.subr.mxu0 0.0
      %816 = vmatpush1.msra.mxu0 0.0
      %817 = vmatprep.subr.mxu0 0.0
      %818 = vmatpush1.msra.mxu0 0.0
      %819 = vmatprep.subr.mxu0 0.0
      %820 = vmatpush1.msra.mxu0 0.0
      %821 = vmatprep.subr.mxu0 0.0
      %822 = vmatpush1.msra.mxu0 0.0
      %823 = vmatprep.subr.mxu0 0.0
      %824 = vmatpush1.msra.mxu0 0.0
      %825 = vmatprep.subr.mxu0 0.0
      %826 = vmatpush1.msra.mxu0 0.0
      %827 = vmatprep.subr.mxu0 0.0
      %828 = vmatpush1.msra.mxu0 0.0
      %829 = vmatprep.subr.mxu0 0.0
      %830 = vmatpush1.msra.mxu0 0.0
      %831 = vmatprep.subr.mxu0 0.0
      %832 = vmatpush1.msra.mxu0 0.0
      %833 = vmatprep.subr.mxu0 0.0
      %834 = vmatpush1.msra.mxu0 0.0
      %835 = vmatprep.subr.mxu0 0.0
      %836 = vmatpush1.msra.mxu0 0.0
      %837 = vmatprep.subr.mxu0 0.0
      %838 = vmatpush1.msra.mxu0 0.0
      %839 = vmatprep.subr.mxu0 0.0
      %840 = vmatpush1.msra.mxu0 0.0
      %841 = vmatprep.subr.mxu0 0.0
      %842 = vmatpush1.msra.mxu0 0.0
      %843 = vmatprep.subr.mxu0 0.0
      %844 = vmatpush1.msra.mxu0 0.0
      %845 = vmatprep.subr.mxu0 0.0
      %846 = vmatpush1.msra.mxu0 0.0
      %847 = vmatprep.subr.mxu0 0.0
      %848 = vmatpush1.msra.mxu0 0.0
      %849 = vmatprep.subr.mxu0 0.0
      %850 = vmatpush1.msra.mxu0 0.0
      %851 = vmatprep.subr.mxu0 0.0
      %852 = vmatpush1.msra.mxu0 0.0
      %853 = vmatprep.subr.mxu0 0.0
      %854 = vmatpush1.msra.mxu0 0.0
      %855 = vmatprep.subr.mxu0 0.0
      %856 = vmatpush1.msra.mxu0 0.0
      %857 = vmatprep.subr.mxu0 0.0
      %858 = vmatpush1.msra.mxu0 0.0
      %859 = vmatprep.subr.mxu0 0.0
      %860 = vmatpush1.msra.mxu0 0.0
      %861 = vmatprep.subr.mxu0 0.0
      %862 = vmatpush1.msra.mxu0 0.0
      %863 = vmatprep.subr.mxu0 0.0
      %864 = vmatpush1.msra.mxu0 0.0
      %865 = vmatprep.subr.mxu0 0.0
      %866 = vmatpush1.msra.mxu0 0.0
      %867 = vmatprep.mubr.f32.mxu0 0.0
      %868 = vmatmul.mubr.f32.gmra.mrb[0].mxu0 %v756
      %v869 = vpop.f32.mrb[0].mxu0
      %v870 = vadd.f32 %v753, %v869
      %v871 = vpop.f32.mrb[0].mxu0
      %872 = vmatprep.mubr.f32.mxu0 0.0
      %873 = vmatmul.mubr.f32.gmra.mrb[0].mxu0 %v759
      %v874 = vpop.f32.mrb[0].mxu0
      %v875 = vadd.f32 %v753, %v874
      %v876 = vpop.f32.mrb[0].mxu0
      %877 = vmatprep.mubr.f32.mxu0 0.0
      %878 = vmatmul.mubr.f32.gmra.mrb[0].mxu0 %v762
      %v879 = vpop.f32.mrb[0].mxu0
      %v880 = vadd.f32 %v753, %v879
      %v881 = vpop.f32.mrb[0].mxu0
      %882 = vmatprep.mubr.f32.mxu0 0.0
      %883 = vmatmul.mubr.f32.gmra.mrb[0].mxu0 %v765
      %v884 = vpop.f32.mrb[0].mxu0
      %v885 = vadd.f32 %v753, %v884
      %v886 = vpop.f32.mrb[0].mxu0
      %887 = vmatprep.mubr.f32.mxu0 0.0
      %888 = vmatmul.mubr.f32.gmra.mrb[0].mxu0 %v768
      %v889 = vpop.f32.mrb[0].mxu0
      %v890 = vadd.f32 %v753, %v889
      %v891 = vpop.f32.mrb[0].mxu0
      %892 = vmatprep.mubr.f32.mxu0 0.0
      %893 = vmatmul.mubr.f32.gmra.mrb[0].mxu0 %v771
      %v894 = vpop.f32.mrb[0].mxu0
      %v895 = vadd.f32 %v753, %v894
      %v896 = vpop.f32.mrb[0].mxu0
      %897 = vmatprep.mubr.f32.mxu0 0.0
      %898 = vmatmul.mubr.f32.gmra.mrb[0].mxu0 %v774
      %v899 = vpop.f32.mrb[0].mxu0
      %v900 = vadd.f32 %v753, %v899
      %v901 = vpop.f32.mrb[0].mxu0
      %902 = vmatprep.mubr.f32.mxu0 0.0
      %903 = vmatmul.mubr.f32.gmra.mrb[0].mxu0 %v777
      %v904 = vpop.f32.mrb[0].mxu0
      %v905 = vadd.f32 %v753, %v904
      %v906 = vpop.f32.mrb[0].mxu0
      %907 = vmatprep.mubr.f32.mxu0 0.0
      %908 = vmatmul.mubr.f32.gmra.mrb[0].mxu0 %v780
      %v909 = vpop.f32.mrb[0].mxu0
      %v910 = vadd.f32 %v753, %v909
      %v911 = vpop.f32.mrb[0].mxu0
      %912 = vmatprep.mubr.f32.mxu0 0.0
      %913 = vmatmul.mubr.f32.gmra.mrb[0].mxu0 %v783
      %v914 = vpop.f32.mrb[0].mxu0
      %v915 = vadd.f32 %v753, %v914
      %v916 = vpop.f32.mrb[0].mxu0
      %917 = vmatprep.mubr.f32.mxu0 0.0
      %918 = vmatmul.mubr.f32.gmra.mrb[0].mxu0 %v786
      %v919 = vpop.f32.mrb[0].mxu0
      %v920 = vadd.f32 %v753, %v919
      %v921 = vpop.f32.mrb[0].mxu0
      %922 = vmatprep.mubr.f32.mxu0 0.0
      %923 = vmatmul.mubr.f32.gmra.mrb[0].mxu0 %v789
      %v924 = vpop.f32.mrb[0].mxu0
      %v925 = vadd.f32 %v753, %v924
      %v926 = vpop.f32.mrb[0].mxu0
      %927 = vmatprep.mubr.f32.mxu0 0.0
      %928 = vmatmul.mubr.f32.gmra.mrb[0].mxu0 %v792
      %v929 = vpop.f32.mrb[0].mxu0
      %v930 = vadd.f32 %v753, %v929
      %v931 = vpop.f32.mrb[0].mxu0
      %932 = vmatprep.mubr.f32.mxu0 0.0
      %933 = vmatmul.mubr.f32.gmra.mrb[0].mxu0 %v795
      %v934 = vpop.f32.mrb[0].mxu0
      %v935 = vadd.f32 %v753, %v934
      %v936 = vpop.f32.mrb[0].mxu0
      %937 = vmatprep.mubr.f32.mxu0 0.0
      %938 = vmatmul.mubr.f32.gmra.mrb[0].mxu0 %v798
      %v939 = vpop.f32.mrb[0].mxu0
      %v940 = vadd.f32 %v753, %v939
      %v941 = vpop.f32.mrb[0].mxu0
      %942 = vmatprep.mubr.f32.mxu0 0.0
      %943 = vmatmul.mubr.f32.gmra.mrb[0].mxu0 %v801
      %v944 = vpop.f32.mrb[0].mxu0
      %v945 = vadd.f32 %v753, %v944
      %v946 = vpop.f32.mrb[0].mxu0
      %947 = vdwg.mxu0
      %vm948 = vcmask 39936
      %949 = vst.msk [vmem:[%s280] sm:$0xff] %vm948, %v870
      %950 = vst.msk [vmem:[%s280 + $0x8] sm:$0xff] %vm948, %v875
      %951 = vst.msk [vmem:[%s280 + $0x10] sm:$0xff] %vm948, %v880
      %952 = vst.msk [vmem:[%s280 + $0x18] sm:$0xff] %vm948, %v885
      %953 = vst.msk [vmem:[%s280 + $0x20] sm:$0xff] %vm948, %v890
      %954 = vst.msk [vmem:[%s280 + $0x28] sm:$0xff] %vm948, %v895
      %955 = vst.msk [vmem:[%s280 + $0x30] sm:$0xff] %vm948, %v900
      %956 = vst.msk [vmem:[%s280 + $0x38] sm:$0xff] %vm948, %v905
      %957 = vst.msk [vmem:[%s280 + $0x40] sm:$0xff] %vm948, %v910
      %958 = vst.msk [vmem:[%s280 + $0x48] sm:$0xff] %vm948, %v915
      %959 = vst.msk [vmem:[%s280 + $0x50] sm:$0xff] %vm948, %v920
      %960 = vst.msk [vmem:[%s280 + $0x58] sm:$0xff] %vm948, %v925
      %961 = vst.msk [vmem:[%s280 + $0x60] sm:$0xff] %vm948, %v930
      %962 = vst.msk [vmem:[%s280 + $0x68] sm:$0xff] %vm948, %v935
      %963 = vst.msk [vmem:[%s280 + $0x70] sm:$0xff] %vm948, %v940
      %964 = vst.msk [vmem:[%s280 + $0x78] sm:$0xff] %vm948, %v945
      %s965 = smul.u32 16, %s18
      %p966 = scmp.lt.s32.totalorder %s965, 31
      %s967 = scalar_select %p966, %s965, 31
      %s968 = smul.addr %s967, 8
      %s969 = scalar_lea.vmem %s7, %s968
      // Predicated region
      $region49: #{tpu_custom_call.1} parent=47 // pred_check
        %p970 = pneg %p188
      $region50: #{tpu_custom_call.1} parent=47 // pred_check_branch
        %972 = sbr.rel (%p970) target = $region52
      $region51: #{tpu_custom_call.1} parent=47 // pred_region
        %s973 = smul.u32 16, %s18
      $region52: #{tpu_custom_call.1} parent=47 // pred_fallthru
        _
    $region48: #{tpu_custom_call.1} parent=5 // pred_fallthru
      _
    %p974 = scmp.le.s32.totalorder 2, %s13
    // Predicated region
    $region53: #{tpu_custom_call.1} parent=5 // pred_check
      %p975 = pneg %p974
    $region54: #{tpu_custom_call.1} parent=5 // pred_check_branch
      %977 = sbr.rel (%p975) target = $region56
    $region55: #{tpu_custom_call.1} parent=5 // pred_region
      %s978 = ssub.s32 %s13, 2
      // Predicated region
      $region57: #{tpu_custom_call.1} parent=55 // pred_check
        %p979 = pneg %p194
      $region58: #{tpu_custom_call.1} parent=55 // pred_check_branch
        %981 = sbr.rel (%p979) target = $region60
      $region59: #{tpu_custom_call.1} parent=55 // pred_region
        %s982 = smul.u32 16, %s19
        %p983 = scmp.lt.s32.totalorder %s982, 31
        %s984 = scalar_select %p983, %s982, 31
        %s985 = smul.addr %s984, 8
        %s986 = scalar_lea.vmem %s7, %s985
      $region60: #{tpu_custom_call.1} parent=55 // pred_fallthru
        _
    $region56: #{tpu_custom_call.1} parent=5 // pred_fallthru
      _
  $region6: #{tpu_custom_call.1} parent=0 // loop_footer
    %s17 = sadd.s32 1, %s13
  $region7: #{tpu_custom_call.1} parent=0 // loop_footer_branch
    %12 = sbr.rel target = $region3
  $region8: #{tpu_custom_call.1} parent=0 // loop_exit
    _

</llo_original>
